<compile_context>
chip_gen: v6e
topology: v6e:2x2x1
jax: 0.10.0
libtpu: 0.0.40
codegen_flags: <defaults>
</compile_context>

<pallas_src>
import functools

import jax
import jax.numpy as jnp
from jax import lax
from jax.experimental import pallas as pl
from jax.experimental.pallas import tpu as pltpu

LEAKY_SLOPE = 0.3
BN_EPS = 1e-5
_MISH_CLAMP = 20.0  # tanh(softplus(y)) == 1.0 in f32 for y >= 20; keeps exp(y)^2 finite.


def _make_resblock_kernel(C, H, W, nblocks, shortcut):
    """Kernel: all `nblocks` residual blocks for one image, activations in VMEM."""
    HW = H * W

    def shifted(x, delta):
        # result[..., f] == x[..., (f + delta) % HW]   (delta may be negative).
        return pltpu.roll(x, (-delta) % HW, axis=1)

    def kernel(x_ref, pos_ref, w_ref, scale_ref, shift_ref, out_ref,
               carry_ref, patch_ref):
        blk = pl.program_id(1)

        # Load the image into the f32 carry once per image. The x block's
        # index_map ignores the block axis, so it is DMA'd only once per image.
        @pl.when(blk == 0)
        def _():
            carry_ref[...] = x_ref[0].astype(jnp.float32)

        # Precomputed row/col id of every flattened-spatial lane position
        # (tiny, VMEM-resident; avoids per-element integer div/mod in-kernel).
        row_id = pos_ref[0:1, :]                       # (1, HW) int32
        col_id = pos_ref[1:2, :]
        top, bottom = row_id == 0, row_id == H - 1
        left_e, right_e = col_id == 0, col_id == W - 1

        def conv_bn_lrelu_mish(x, stage):
            # ---- 3x3 'reflect' conv taps, built in-register with lane rolls +
            #      boundary selects; written once into the im2col scratch slab.
            x_up = shifted(x, -W)                      # row i-1 (wrap fixed below)
            x_dn = shifted(x, +W)                      # row i+1
            r_m1 = jnp.where(top, x_dn, x_up)          # reflect: row -1 -> row 1
            r_p1 = jnp.where(bottom, x_up, x_dn)       # reflect: row H -> row H-2
            for dy, base in enumerate((r_m1, x, r_p1)):
                b_l = shifted(base, -1)                # col j-1
                b_r = shifted(base, +1)                # col j+1
                c_m1 = jnp.where(left_e, b_r, b_l)     # reflect: col -1 -> col 1
                c_p1 = jnp.where(right_e, b_l, b_r)    # reflect: col W -> col W-2
                for dx, tap in enumerate((c_m1, base, c_p1)):
                    t = 3 * dy + dx
                    patch_ref[t * C:(t + 1) * C, :] = tap
            # ---- one im2col matmul on the MXU: (C, 9C) @ (9C, HW) -> (C, HW)
            y = jnp.dot(w_ref[0, stage].astype(jnp.float32), patch_ref[...],
                        preferred_element_type=jnp.float32)
            # ---- folded BatchNorm (eval mode) + LeakyReLU(0.3)
            y = y * scale_ref[0, stage] + shift_ref[0, stage]
            y = jnp.maximum(y, LEAKY_SLOPE * y)        # slope < 1 => max == leaky_relu
            # ---- Mish with a single exp: tanh(softplus(y)) = (s-1)/(s+1)
            t_ = jnp.exp(jnp.minimum(y, _MISH_CLAMP))
            s_ = (1.0 + t_) * (1.0 + t_)
            den = s_ + 1.0
            inv = pl.reciprocal(den, approx=True)
            inv = inv * (2.0 - den * inv)              # one Newton step -> f32 accurate
            return y * (s_ - 1.0) * inv

        x0 = carry_ref[...]                            # (C, HW) f32
        h = conv_bn_lrelu_mish(x0, 0)
        h = conv_bn_lrelu_mish(h, 1)
        h = x0 + h if shortcut else h
        carry_ref[...] = h

        @pl.when(blk == nblocks - 1)
        def _():
            out_ref[0] = h.astype(out_ref.dtype)

    return kernel


@functools.partial(jax.jit, static_argnames=("shortcut",))
def res_block_forward(x_nchw, wmat, scale, shift, shortcut=True):
    """ResBlock.forward. Input/output are NCHW (PyTorch convention)."""
    N, C, H, W = x_nchw.shape
    nblocks = wmat.shape[0]
    HW = H * W

    # Free reshape: flat spatial axis becomes the (lane-dense) minor dimension.
    x2 = x_nchw.reshape(N, C, HW)
    ids = jnp.arange(HW, dtype=jnp.int32)
    pos = jnp.stack([ids // W, ids % W]).astype(jnp.int32)        # (2, HW)

    kernel = _make_resblock_kernel(C, H, W, nblocks, shortcut)
    # TODO(synk): for large H*W*C (especially v7x's 64 MiB VMEM), add row-band
    # spatial tiling with a halo + a matching vmem_limit_bytes; full-image
    # blocks are right at these shapes and keep the nblocks carry fully fused.
    out = pl.pallas_call(
        kernel,
        out_shape=jax.ShapeDtypeStruct((N, C, HW), x_nchw.dtype),
        grid=(N, nblocks),
        in_specs=[
            pl.BlockSpec((1, C, HW), lambda n, b: (n, 0, 0)),           # image (resident over b)
            pl.BlockSpec((2, HW), lambda n, b: (0, 0)),                 # row/col ids (resident)
            pl.BlockSpec((1, 2, C, 9 * C), lambda n, b: (b, 0, 0, 0)),  # per-block packed weights
            pl.BlockSpec((1, 2, C, 1), lambda n, b: (b, 0, 0, 0)),      # folded BN scale
            pl.BlockSpec((1, 2, C, 1), lambda n, b: (b, 0, 0, 0)),      # folded BN shift
        ],
        out_specs=pl.BlockSpec((1, C, HW), lambda n, b: (n, 0, 0)),
        scratch_shapes=[
            pltpu.VMEM((C, HW), jnp.float32),        # activation carry across blocks
            pltpu.VMEM((9 * C, HW), jnp.float32),    # im2col patch slab
        ],
        compiler_params=pltpu.CompilerParams(
            dimension_semantics=("parallel", "arbitrary")),
    )(x2, pos, wmat, scale, shift)
    return out.reshape(N, C, H, W)


def init_resblock_params(key, ch, nblocks):
    """Deterministic synthetic parameters matching ResBlock.__init__ shapes."""
    params = []
    for _ in range(nblocks):
        block = []
        for _ in range(2):  # two ConvBN layers per residual block
            key, kw, kg, kb, km, kv = jax.random.split(key, 6)
            w = jax.random.normal(kw, (3, 3, ch, ch), jnp.float32) * 0.1  # HWIO
            gamma = 1.0 + 0.1 * jax.random.normal(kg, (ch,), jnp.float32)
            beta = 0.1 * jax.random.normal(kb, (ch,), jnp.float32)
            run_mean = 0.1 * jax.random.normal(km, (ch,), jnp.float32)
            run_var = jnp.abs(jax.random.normal(kv, (ch,), jnp.float32)) + 0.5
            scale = gamma / jnp.sqrt(run_var + BN_EPS)   # eval-mode BN folding
            shift = beta - run_mean * scale
            block.append({"w": w, "scale": scale, "shift": shift})
        params.append(block)
    return params


def pack_params(params):
    """Stack per-layer params into the kernel's matmul-ready layout.

    wmat[b, s, co, (dy*3+dx)*C + ci] = w_hwio[dy, dx, ci, co]
    """
    ch = params[0][0]["w"].shape[2]
    wmat = jnp.stack([
        jnp.stack([jnp.transpose(p["w"], (3, 0, 1, 2)).reshape(ch, 9 * ch)
                   for p in blk]) for blk in params])
    scale = jnp.stack([jnp.stack([p["scale"].reshape(ch, 1) for p in blk])
                       for blk in params])
    shift = jnp.stack([jnp.stack([p["shift"].reshape(ch, 1) for p in blk])
                       for blk in params])
    return wmat, scale, shift


# ---------------- pure-JAX reference for correctness checking ----------------
def _ref_conv_bn_mish(x, w, scale, shift):
    xpad = jnp.pad(x, ((0, 0), (1, 1), (1, 1), (0, 0)), mode="reflect")
    y = lax.conv_general_dilated(
        xpad, w, window_strides=(1, 1), padding="VALID",
        dimension_numbers=("NHWC", "HWIO", "NHWC"))
    y = y * scale + shift
    y = jnp.where(y > 0, y, LEAKY_SLOPE * y)
    return y * jnp.tanh(jax.nn.softplus(y))


def _ref_forward(x_nchw, params, shortcut=True):
    x = jnp.transpose(x_nchw, (0, 2, 3, 1))
    for block in params:
        h = x
        for p in block:
            h = _ref_conv_bn_mish(h, p["w"], p["scale"], p["shift"])
        x = x + h if shortcut else h
    return jnp.transpose(x, (0, 3, 1, 2))


if __name__ == "__main__":
    N, C, H, W = 2, 4, 16, 16
    nblocks = 2

    key = jax.random.PRNGKey(0)
    kx, kp = jax.random.split(key)
    x = jax.random.normal(kx, (N, C, H, W), jnp.float32)
    params = init_resblock_params(kp, C, nblocks)
    wmat, scale, shift = pack_params(params)

    out = res_block_forward(x, wmat, scale, shift, shortcut=True)
    out = jax.block_until_ready(out)

    ref = _ref_forward(x, params, shortcut=True)
    assert out.shape == (N, C, H, W)
    err = float(jnp.max(jnp.abs(out - ref)))
    # Tolerance covers the approx-reciprocal (Newton-refined) Mish path.
    assert jnp.allclose(out, ref, rtol=1e-3, atol=1e-3), (
        f"mismatch vs reference (max abs err={err})")

    print("KERNEL_OK")
</pallas_src>

<mosaic_0001>
module attributes {stable_mosaic.version = 11 : i64} {
  func.func @kernel(%arg0: i32, %arg1: i32, %arg2: memref<1x4x256xf32, #tpu.memory_space<vmem>>, %arg3: memref<2x256xi32, #tpu.memory_space<vmem>>, %arg4: memref<1x2x4x36xf32, #tpu.memory_space<vmem>>, %arg5: memref<1x2x4x1xf32, #tpu.memory_space<vmem>>, %arg6: memref<1x2x4x1xf32, #tpu.memory_space<vmem>>, %arg7: memref<1x4x256xf32, #tpu.memory_space<vmem>>, %arg8: memref<4x256xf32, #tpu.memory_space<vmem>>, %arg9: memref<36x256xf32, #tpu.memory_space<vmem>>) attributes {dimension_semantics = [#tpu.dimension_semantics<parallel>, #tpu.dimension_semantics<arbitrary>], iteration_bounds = array<i64: 2, 2>, scalar_prefetch = 0 : i64, scratch_operands = 2 : i64, tpu.core_type = #tpu.core_type<tc>, window_params = [{transform_indices = @transform_0, window_bounds = array<i64: 1, 4, 256>}, {pipeline_mode = #tpu.pipeline_mode<synchronous>, transform_indices = @transform_1, window_bounds = array<i64: 2, 256>}, {transform_indices = @transform_2, window_bounds = array<i64: 1, 2, 4, 36>}, {transform_indices = @transform_3, window_bounds = array<i64: 1, 2, 4, 1>}, {transform_indices = @transform_4, window_bounds = array<i64: 1, 2, 4, 1>}, {transform_indices = @transform_5, window_bounds = array<i64: 1, 4, 256>}]} {
    %c0_i32 = arith.constant 0 : i32
    %0 = arith.cmpi eq, %arg1, %c0_i32 : i32
    %1 = arith.extui %0 : i1 to i32
    %c0_i32_0 = arith.constant 0 : i32
    %2 = arith.cmpi ne, %1, %c0_i32_0 : i32
    scf.if %2 {
      %c0_95 = arith.constant 0 : index
      %c0_96 = arith.constant 0 : index
      %c0_97 = arith.constant 0 : index
      %169 = vector.load %arg2[%c0_95, %c0_96, %c0_97] : memref<1x4x256xf32, #tpu.memory_space<vmem>>, vector<1x4x256xf32>
      %170 = vector.shape_cast %169 : vector<1x4x256xf32> to vector<4x256xf32>
      %c0_98 = arith.constant 0 : index
      %c0_99 = arith.constant 0 : index
      %171 = vector.load %arg8[%c0_98, %c0_99] : memref<4x256xf32, #tpu.memory_space<vmem>>, vector<4x256xf32>
      tpu.vector_store %arg8[%c0_98, %c0_99], %170 {strides = array<i32>} : memref<4x256xf32, #tpu.memory_space<vmem>>, vector<4x256xf32>,
    } else {
    }
    %c0 = arith.constant 0 : index
    %c0_1 = arith.constant 0 : index
    %3 = vector.load %arg3[%c0, %c0_1] : memref<2x256xi32, #tpu.memory_space<vmem>>, vector<1x256xi32>
    %c1 = arith.constant 1 : index
    %c0_2 = arith.constant 0 : index
    %4 = vector.load %arg3[%c1, %c0_2] : memref<2x256xi32, #tpu.memory_space<vmem>>, vector<1x256xi32>
    %c0_i32_3 = arith.constant 0 : i32
    %5 = vector.broadcast %c0_i32_3 : i32 to vector<1x256xi32>
    %6 = arith.cmpi eq, %3, %5 : vector<1x256xi32>
    %c15_i32 = arith.constant 15 : i32
    %7 = vector.broadcast %c15_i32 : i32 to vector<1x256xi32>
    %8 = arith.cmpi eq, %3, %7 : vector<1x256xi32>
    %c0_i32_4 = arith.constant 0 : i32
    %9 = vector.broadcast %c0_i32_4 : i32 to vector<1x256xi32>
    %10 = arith.cmpi eq, %4, %9 : vector<1x256xi32>
    %c15_i32_5 = arith.constant 15 : i32
    %11 = vector.broadcast %c15_i32_5 : i32 to vector<1x256xi32>
    %12 = arith.cmpi eq, %4, %11 : vector<1x256xi32>
    %c0_6 = arith.constant 0 : index
    %c0_7 = arith.constant 0 : index
    %13 = vector.load %arg8[%c0_6, %c0_7] : memref<4x256xf32, #tpu.memory_space<vmem>>, vector<4x256xf32>
    %c16_i32 = arith.constant 16 : i32
    %14 = tpu.dynamic_rotate %13 by %c16_i32 dim 1 : vector<4x256xf32>, i32 -> vector<4x256xf32>
    %c240_i32 = arith.constant 240 : i32
    %15 = tpu.dynamic_rotate %13 by %c240_i32 dim 1 : vector<4x256xf32>, i32 -> vector<4x256xf32>
    %16 = vector.shape_cast %6 : vector<1x256xi1> to vector<1x256xi1>
    %17 = vector.broadcast %16 : vector<1x256xi1> to vector<4x256xi1>
    %18 = arith.select %17, %15, %14 : vector<4x256xi1>, vector<4x256xf32>
    %19 = vector.shape_cast %8 : vector<1x256xi1> to vector<1x256xi1>
    %20 = vector.broadcast %19 : vector<1x256xi1> to vector<4x256xi1>
    %21 = arith.select %20, %14, %15 : vector<4x256xi1>, vector<4x256xf32>
    %c1_i32 = arith.constant 1 : i32
    %22 = tpu.dynamic_rotate %18 by %c1_i32 dim 1 : vector<4x256xf32>, i32 -> vector<4x256xf32>
    %c255_i32 = arith.constant 255 : i32
    %23 = tpu.dynamic_rotate %18 by %c255_i32 dim 1 : vector<4x256xf32>, i32 -> vector<4x256xf32>
    %24 = vector.shape_cast %10 : vector<1x256xi1> to vector<1x256xi1>
    %25 = vector.broadcast %24 : vector<1x256xi1> to vector<4x256xi1>
    %26 = arith.select %25, %23, %22 : vector<4x256xi1>, vector<4x256xf32>
    %27 = vector.shape_cast %12 : vector<1x256xi1> to vector<1x256xi1>
    %28 = vector.broadcast %27 : vector<1x256xi1> to vector<4x256xi1>
    %29 = arith.select %28, %22, %23 : vector<4x256xi1>, vector<4x256xf32>
    %c0_8 = arith.constant 0 : index
    %c0_9 = arith.constant 0 : index
    %30 = vector.load %arg9[%c0_8, %c0_9] : memref<36x256xf32, #tpu.memory_space<vmem>>, vector<4x256xf32>
    tpu.vector_store %arg9[%c0_8, %c0_9], %26 {strides = array<i32>} : memref<36x256xf32, #tpu.memory_space<vmem>>, vector<4x256xf32>,
    %c4 = arith.constant 4 : index
    %c0_10 = arith.constant 0 : index
    %31 = vector.load %arg9[%c4, %c0_10] : memref<36x256xf32, #tpu.memory_space<vmem>>, vector<4x256xf32>
    tpu.vector_store %arg9[%c4, %c0_10], %18 {strides = array<i32>} : memref<36x256xf32, #tpu.memory_space<vmem>>, vector<4x256xf32>,
    %c8 = arith.constant 8 : index
    %c0_11 = arith.constant 0 : index
    %32 = vector.load %arg9[%c8, %c0_11] : memref<36x256xf32, #tpu.memory_space<vmem>>, vector<4x256xf32>
    tpu.vector_store %arg9[%c8, %c0_11], %29 {strides = array<i32>} : memref<36x256xf32, #tpu.memory_space<vmem>>, vector<4x256xf32>,
    %c1_i32_12 = arith.constant 1 : i32
    %33 = tpu.dynamic_rotate %13 by %c1_i32_12 dim 1 : vector<4x256xf32>, i32 -> vector<4x256xf32>
    %c255_i32_13 = arith.constant 255 : i32
    %34 = tpu.dynamic_rotate %13 by %c255_i32_13 dim 1 : vector<4x256xf32>, i32 -> vector<4x256xf32>
    %35 = vector.shape_cast %10 : vector<1x256xi1> to vector<1x256xi1>
    %36 = vector.broadcast %35 : vector<1x256xi1> to vector<4x256xi1>
    %37 = arith.select %36, %34, %33 : vector<4x256xi1>, vector<4x256xf32>
    %38 = vector.shape_cast %12 : vector<1x256xi1> to vector<1x256xi1>
    %39 = vector.broadcast %38 : vector<1x256xi1> to vector<4x256xi1>
    %40 = arith.select %39, %33, %34 : vector<4x256xi1>, vector<4x256xf32>
    %c12 = arith.constant 12 : index
    %c0_14 = arith.constant 0 : index
    %41 = vector.load %arg9[%c12, %c0_14] : memref<36x256xf32, #tpu.memory_space<vmem>>, vector<4x256xf32>
    tpu.vector_store %arg9[%c12, %c0_14], %37 {strides = array<i32>} : memref<36x256xf32, #tpu.memory_space<vmem>>, vector<4x256xf32>,
    %c16 = arith.constant 16 : index
    %c0_15 = arith.constant 0 : index
    %42 = vector.load %arg9[%c16, %c0_15] : memref<36x256xf32, #tpu.memory_space<vmem>>, vector<4x256xf32>
    tpu.vector_store %arg9[%c16, %c0_15], %13 {strides = array<i32>} : memref<36x256xf32, #tpu.memory_space<vmem>>, vector<4x256xf32>,
    %c20 = arith.constant 20 : index
    %c0_16 = arith.constant 0 : index
    %43 = vector.load %arg9[%c20, %c0_16] : memref<36x256xf32, #tpu.memory_space<vmem>>, vector<4x256xf32>
    tpu.vector_store %arg9[%c20, %c0_16], %40 {strides = array<i32>} : memref<36x256xf32, #tpu.memory_space<vmem>>, vector<4x256xf32>,
    %c1_i32_17 = arith.constant 1 : i32
    %44 = tpu.dynamic_rotate %21 by %c1_i32_17 dim 1 : vector<4x256xf32>, i32 -> vector<4x256xf32>
    %c255_i32_18 = arith.constant 255 : i32
    %45 = tpu.dynamic_rotate %21 by %c255_i32_18 dim 1 : vector<4x256xf32>, i32 -> vector<4x256xf32>
    %46 = vector.shape_cast %10 : vector<1x256xi1> to vector<1x256xi1>
    %47 = vector.broadcast %46 : vector<1x256xi1> to vector<4x256xi1>
    %48 = arith.select %47, %45, %44 : vector<4x256xi1>, vector<4x256xf32>
    %49 = vector.shape_cast %12 : vector<1x256xi1> to vector<1x256xi1>
    %50 = vector.broadcast %49 : vector<1x256xi1> to vector<4x256xi1>
    %51 = arith.select %50, %44, %45 : vector<4x256xi1>, vector<4x256xf32>
    %c24 = arith.constant 24 : index
    %c0_19 = arith.constant 0 : index
    %52 = vector.load %arg9[%c24, %c0_19] : memref<36x256xf32, #tpu.memory_space<vmem>>, vector<4x256xf32>
    tpu.vector_store %arg9[%c24, %c0_19], %48 {strides = array<i32>} : memref<36x256xf32, #tpu.memory_space<vmem>>, vector<4x256xf32>,
    %c28 = arith.constant 28 : index
    %c0_20 = arith.constant 0 : index
    %53 = vector.load %arg9[%c28, %c0_20] : memref<36x256xf32, #tpu.memory_space<vmem>>, vector<4x256xf32>
    tpu.vector_store %arg9[%c28, %c0_20], %21 {strides = array<i32>} : memref<36x256xf32, #tpu.memory_space<vmem>>, vector<4x256xf32>,
    %c32 = arith.constant 32 : index
    %c0_21 = arith.constant 0 : index
    %54 = vector.load %arg9[%c32, %c0_21] : memref<36x256xf32, #tpu.memory_space<vmem>>, vector<4x256xf32>
    tpu.vector_store %arg9[%c32, %c0_21], %51 {strides = array<i32>} : memref<36x256xf32, #tpu.memory_space<vmem>>, vector<4x256xf32>,
    %c0_22 = arith.constant 0 : index
    %c0_23 = arith.constant 0 : index
    %c0_24 = arith.constant 0 : index
    %c0_25 = arith.constant 0 : index
    %55 = vector.load %arg4[%c0_22, %c0_23, %c0_24, %c0_25] : memref<1x2x4x36xf32, #tpu.memory_space<vmem>>, vector<1x1x4x36xf32>
    %56 = vector.shape_cast %55 : vector<1x1x4x36xf32> to vector<4x36xf32>
    %c0_26 = arith.constant 0 : index
    %c0_27 = arith.constant 0 : index
    %57 = vector.load %arg9[%c0_26, %c0_27] : memref<36x256xf32, #tpu.memory_space<vmem>>, vector<36x256xf32>
    %cst = arith.constant dense<0.000000e+00> : vector<4x256xf32>
    %58 = tpu.matmul %56, %57, %cst {dimension_numbers = #tpu.dot_dimension_numbers<[1], [0], [0], [1], [0, 0, 1, 1], [], []>} : vector<4x36xf32>, vector<36x256xf32>, vector<4x256xf32> -> vector<4x256xf32>
    %c0_28 = arith.constant 0 : index
    %c0_29 = arith.constant 0 : index
    %c0_30 = arith.constant 0 : index
    %c0_31 = arith.constant 0 : index
    %59 = vector.load %arg5[%c0_28, %c0_29, %c0_30, %c0_31] : memref<1x2x4x1xf32, #tpu.memory_space<vmem>>, vector<1x1x4x1xf32>
    %60 = vector.shape_cast %59 : vector<1x1x4x1xf32> to vector<4x1xf32>
    %61 = vector.broadcast %60 : vector<4x1xf32> to vector<4x256xf32>
    %62 = arith.mulf %58, %61 : vector<4x256xf32>
    %c0_32 = arith.constant 0 : index
    %c0_33 = arith.constant 0 : index
    %c0_34 = arith.constant 0 : index
    %c0_35 = arith.constant 0 : index
    %63 = vector.load %arg6[%c0_32, %c0_33, %c0_34, %c0_35] : memref<1x2x4x1xf32, #tpu.memory_space<vmem>>, vector<1x1x4x1xf32>
    %64 = vector.shape_cast %63 : vector<1x1x4x1xf32> to vector<4x1xf32>
    %65 = vector.broadcast %64 : vector<4x1xf32> to vector<4x256xf32>
    %66 = arith.addf %62, %65 : vector<4x256xf32>
    %cst_36 = arith.constant 3.000000e-01 : f32
    %67 = vector.broadcast %cst_36 : f32 to vector<4x256xf32>
    %68 = arith.mulf %67, %66 : vector<4x256xf32>
    %69 = arith.maximumf %66, %68 : vector<4x256xf32>
    %cst_37 = arith.constant 2.000000e+01 : f32
    %70 = vector.broadcast %cst_37 : f32 to vector<4x256xf32>
    %71 = arith.minimumf %69, %70 : vector<4x256xf32>
    %72 = math.exp %71 : vector<4x256xf32>
    %cst_38 = arith.constant 1.000000e+00 : f32
    %73 = vector.broadcast %cst_38 : f32 to vector<4x256xf32>
    %74 = arith.addf %73, %72 : vector<4x256xf32>
    %cst_39 = arith.constant 1.000000e+00 : f32
    %75 = vector.broadcast %cst_39 : f32 to vector<4x256xf32>
    %76 = arith.addf %75, %72 : vector<4x256xf32>
    %77 = arith.mulf %74, %76 : vector<4x256xf32>
    %cst_40 = arith.constant 1.000000e+00 : f32
    %78 = vector.broadcast %cst_40 : f32 to vector<4x256xf32>
    %79 = arith.addf %77, %78 : vector<4x256xf32>
    %80 = tpu.reciprocal %79 {approx = true} : vector<4x256xf32> -> vector<4x256xf32>
    %81 = arith.mulf %79, %80 : vector<4x256xf32>
    %cst_41 = arith.constant 2.000000e+00 : f32
    %82 = vector.broadcast %cst_41 : f32 to vector<4x256xf32>
    %83 = arith.subf %82, %81 : vector<4x256xf32>
    %84 = arith.mulf %80, %83 : vector<4x256xf32>
    %cst_42 = arith.constant 1.000000e+00 : f32
    %85 = vector.broadcast %cst_42 : f32 to vector<4x256xf32>
    %86 = arith.subf %77, %85 : vector<4x256xf32>
    %87 = arith.mulf %69, %86 : vector<4x256xf32>
    %88 = arith.mulf %87, %84 : vector<4x256xf32>
    %c16_i32_43 = arith.constant 16 : i32
    %89 = tpu.dynamic_rotate %88 by %c16_i32_43 dim 1 : vector<4x256xf32>, i32 -> vector<4x256xf32>
    %c240_i32_44 = arith.constant 240 : i32
    %90 = tpu.dynamic_rotate %88 by %c240_i32_44 dim 1 : vector<4x256xf32>, i32 -> vector<4x256xf32>
    %91 = vector.shape_cast %6 : vector<1x256xi1> to vector<1x256xi1>
    %92 = vector.broadcast %91 : vector<1x256xi1> to vector<4x256xi1>
    %93 = arith.select %92, %90, %89 : vector<4x256xi1>, vector<4x256xf32>
    %94 = vector.shape_cast %8 : vector<1x256xi1> to vector<1x256xi1>
    %95 = vector.broadcast %94 : vector<1x256xi1> to vector<4x256xi1>
    %96 = arith.select %95, %89, %90 : vector<4x256xi1>, vector<4x256xf32>
    %c1_i32_45 = arith.constant 1 : i32
    %97 = tpu.dynamic_rotate %93 by %c1_i32_45 dim 1 : vector<4x256xf32>, i32 -> vector<4x256xf32>
    %c255_i32_46 = arith.constant 255 : i32
    %98 = tpu.dynamic_rotate %93 by %c255_i32_46 dim 1 : vector<4x256xf32>, i32 -> vector<4x256xf32>
    %99 = vector.shape_cast %10 : vector<1x256xi1> to vector<1x256xi1>
    %100 = vector.broadcast %99 : vector<1x256xi1> to vector<4x256xi1>
    %101 = arith.select %100, %98, %97 : vector<4x256xi1>, vector<4x256xf32>
    %102 = vector.shape_cast %12 : vector<1x256xi1> to vector<1x256xi1>
    %103 = vector.broadcast %102 : vector<1x256xi1> to vector<4x256xi1>
    %104 = arith.select %103, %97, %98 : vector<4x256xi1>, vector<4x256xf32>
    %c0_47 = arith.constant 0 : index
    %c0_48 = arith.constant 0 : index
    %105 = vector.load %arg9[%c0_47, %c0_48] : memref<36x256xf32, #tpu.memory_space<vmem>>, vector<4x256xf32>
    tpu.vector_store %arg9[%c0_47, %c0_48], %101 {strides = array<i32>} : memref<36x256xf32, #tpu.memory_space<vmem>>, vector<4x256xf32>,
    %c4_49 = arith.constant 4 : index
    %c0_50 = arith.constant 0 : index
    %106 = vector.load %arg9[%c4_49, %c0_50] : memref<36x256xf32, #tpu.memory_space<vmem>>, vector<4x256xf32>
    tpu.vector_store %arg9[%c4_49, %c0_50], %93 {strides = array<i32>} : memref<36x256xf32, #tpu.memory_space<vmem>>, vector<4x256xf32>,
    %c8_51 = arith.constant 8 : index
    %c0_52 = arith.constant 0 : index
    %107 = vector.load %arg9[%c8_51, %c0_52] : memref<36x256xf32, #tpu.memory_space<vmem>>, vector<4x256xf32>
    tpu.vector_store %arg9[%c8_51, %c0_52], %104 {strides = array<i32>} : memref<36x256xf32, #tpu.memory_space<vmem>>, vector<4x256xf32>,
    %c1_i32_53 = arith.constant 1 : i32
    %108 = tpu.dynamic_rotate %88 by %c1_i32_53 dim 1 : vector<4x256xf32>, i32 -> vector<4x256xf32>
    %c255_i32_54 = arith.constant 255 : i32
    %109 = tpu.dynamic_rotate %88 by %c255_i32_54 dim 1 : vector<4x256xf32>, i32 -> vector<4x256xf32>
    %110 = vector.shape_cast %10 : vector<1x256xi1> to vector<1x256xi1>
    %111 = vector.broadcast %110 : vector<1x256xi1> to vector<4x256xi1>
    %112 = arith.select %111, %109, %108 : vector<4x256xi1>, vector<4x256xf32>
    %113 = vector.shape_cast %12 : vector<1x256xi1> to vector<1x256xi1>
    %114 = vector.broadcast %113 : vector<1x256xi1> to vector<4x256xi1>
    %115 = arith.select %114, %108, %109 : vector<4x256xi1>, vector<4x256xf32>
    %c12_55 = arith.constant 12 : index
    %c0_56 = arith.constant 0 : index
    %116 = vector.load %arg9[%c12_55, %c0_56] : memref<36x256xf32, #tpu.memory_space<vmem>>, vector<4x256xf32>
    tpu.vector_store %arg9[%c12_55, %c0_56], %112 {strides = array<i32>} : memref<36x256xf32, #tpu.memory_space<vmem>>, vector<4x256xf32>,
    %c16_57 = arith.constant 16 : index
    %c0_58 = arith.constant 0 : index
    %117 = vector.load %arg9[%c16_57, %c0_58] : memref<36x256xf32, #tpu.memory_space<vmem>>, vector<4x256xf32>
    tpu.vector_store %arg9[%c16_57, %c0_58], %88 {strides = array<i32>} : memref<36x256xf32, #tpu.memory_space<vmem>>, vector<4x256xf32>,
    %c20_59 = arith.constant 20 : index
    %c0_60 = arith.constant 0 : index
    %118 = vector.load %arg9[%c20_59, %c0_60] : memref<36x256xf32, #tpu.memory_space<vmem>>, vector<4x256xf32>
    tpu.vector_store %arg9[%c20_59, %c0_60], %115 {strides = array<i32>} : memref<36x256xf32, #tpu.memory_space<vmem>>, vector<4x256xf32>,
    %c1_i32_61 = arith.constant 1 : i32
    %119 = tpu.dynamic_rotate %96 by %c1_i32_61 dim 1 : vector<4x256xf32>, i32 -> vector<4x256xf32>
    %c255_i32_62 = arith.constant 255 : i32
    %120 = tpu.dynamic_rotate %96 by %c255_i32_62 dim 1 : vector<4x256xf32>, i32 -> vector<4x256xf32>
    %121 = vector.shape_cast %10 : vector<1x256xi1> to vector<1x256xi1>
    %122 = vector.broadcast %121 : vector<1x256xi1> to vector<4x256xi1>
    %123 = arith.select %122, %120, %119 : vector<4x256xi1>, vector<4x256xf32>
    %124 = vector.shape_cast %12 : vector<1x256xi1> to vector<1x256xi1>
    %125 = vector.broadcast %124 : vector<1x256xi1> to vector<4x256xi1>
    %126 = arith.select %125, %119, %120 : vector<4x256xi1>, vector<4x256xf32>
    %c24_63 = arith.constant 24 : index
    %c0_64 = arith.constant 0 : index
    %127 = vector.load %arg9[%c24_63, %c0_64] : memref<36x256xf32, #tpu.memory_space<vmem>>, vector<4x256xf32>
    tpu.vector_store %arg9[%c24_63, %c0_64], %123 {strides = array<i32>} : memref<36x256xf32, #tpu.memory_space<vmem>>, vector<4x256xf32>,
    %c28_65 = arith.constant 28 : index
    %c0_66 = arith.constant 0 : index
    %128 = vector.load %arg9[%c28_65, %c0_66] : memref<36x256xf32, #tpu.memory_space<vmem>>, vector<4x256xf32>
    tpu.vector_store %arg9[%c28_65, %c0_66], %96 {strides = array<i32>} : memref<36x256xf32, #tpu.memory_space<vmem>>, vector<4x256xf32>,
    %c32_67 = arith.constant 32 : index
    %c0_68 = arith.constant 0 : index
    %129 = vector.load %arg9[%c32_67, %c0_68] : memref<36x256xf32, #tpu.memory_space<vmem>>, vector<4x256xf32>
    tpu.vector_store %arg9[%c32_67, %c0_68], %126 {strides = array<i32>} : memref<36x256xf32, #tpu.memory_space<vmem>>, vector<4x256xf32>,
    %c0_69 = arith.constant 0 : index
    %c1_70 = arith.constant 1 : index
    %c0_71 = arith.constant 0 : index
    %c0_72 = arith.constant 0 : index
    %130 = vector.load %arg4[%c0_69, %c1_70, %c0_71, %c0_72] : memref<1x2x4x36xf32, #tpu.memory_space<vmem>>, vector<1x1x4x36xf32>
    %131 = vector.shape_cast %130 : vector<1x1x4x36xf32> to vector<4x36xf32>
    %c0_73 = arith.constant 0 : index
    %c0_74 = arith.constant 0 : index
    %132 = vector.load %arg9[%c0_73, %c0_74] : memref<36x256xf32, #tpu.memory_space<vmem>>, vector<36x256xf32>
    %cst_75 = arith.constant dense<0.000000e+00> : vector<4x256xf32>
    %133 = tpu.matmul %131, %132, %cst_75 {dimension_numbers = #tpu.dot_dimension_numbers<[1], [0], [0], [1], [0, 0, 1, 1], [], []>} : vector<4x36xf32>, vector<36x256xf32>, vector<4x256xf32> -> vector<4x256xf32>
    %c0_76 = arith.constant 0 : index
    %c1_77 = arith.constant 1 : index
    %c0_78 = arith.constant 0 : index
    %c0_79 = arith.constant 0 : index
    %134 = vector.load %arg5[%c0_76, %c1_77, %c0_78, %c0_79] : memref<1x2x4x1xf32, #tpu.memory_space<vmem>>, vector<1x1x4x1xf32>
    %135 = vector.shape_cast %134 : vector<1x1x4x1xf32> to vector<4x1xf32>
    %136 = vector.broadcast %135 : vector<4x1xf32> to vector<4x256xf32>
    %137 = arith.mulf %133, %136 : vector<4x256xf32>
    %c0_80 = arith.constant 0 : index
    %c1_81 = arith.constant 1 : index
    %c0_82 = arith.constant 0 : index
    %c0_83 = arith.constant 0 : index
    %138 = vector.load %arg6[%c0_80, %c1_81, %c0_82, %c0_83] : memref<1x2x4x1xf32, #tpu.memory_space<vmem>>, vector<1x1x4x1xf32>
    %139 = vector.shape_cast %138 : vector<1x1x4x1xf32> to vector<4x1xf32>
    %140 = vector.broadcast %139 : vector<4x1xf32> to vector<4x256xf32>
    %141 = arith.addf %137, %140 : vector<4x256xf32>
    %cst_84 = arith.constant 3.000000e-01 : f32
    %142 = vector.broadcast %cst_84 : f32 to vector<4x256xf32>
    %143 = arith.mulf %142, %141 : vector<4x256xf32>
    %144 = arith.maximumf %141, %143 : vector<4x256xf32>
    %cst_85 = arith.constant 2.000000e+01 : f32
    %145 = vector.broadcast %cst_85 : f32 to vector<4x256xf32>
    %146 = arith.minimumf %144, %145 : vector<4x256xf32>
    %147 = math.exp %146 : vector<4x256xf32>
    %cst_86 = arith.constant 1.000000e+00 : f32
    %148 = vector.broadcast %cst_86 : f32 to vector<4x256xf32>
    %149 = arith.addf %148, %147 : vector<4x256xf32>
    %cst_87 = arith.constant 1.000000e+00 : f32
    %150 = vector.broadcast %cst_87 : f32 to vector<4x256xf32>
    %151 = arith.addf %150, %147 : vector<4x256xf32>
    %152 = arith.mulf %149, %151 : vector<4x256xf32>
    %cst_88 = arith.constant 1.000000e+00 : f32
    %153 = vector.broadcast %cst_88 : f32 to vector<4x256xf32>
    %154 = arith.addf %152, %153 : vector<4x256xf32>
    %155 = tpu.reciprocal %154 {approx = true} : vector<4x256xf32> -> vector<4x256xf32>
    %156 = arith.mulf %154, %155 : vector<4x256xf32>
    %cst_89 = arith.constant 2.000000e+00 : f32
    %157 = vector.broadcast %cst_89 : f32 to vector<4x256xf32>
    %158 = arith.subf %157, %156 : vector<4x256xf32>
    %159 = arith.mulf %155, %158 : vector<4x256xf32>
    %cst_90 = arith.constant 1.000000e+00 : f32
    %160 = vector.broadcast %cst_90 : f32 to vector<4x256xf32>
    %161 = arith.subf %152, %160 : vector<4x256xf32>
    %162 = arith.mulf %144, %161 : vector<4x256xf32>
    %163 = arith.mulf %162, %159 : vector<4x256xf32>
    %164 = arith.addf %13, %163 : vector<4x256xf32>
    %c0_91 = arith.constant 0 : index
    %c0_92 = arith.constant 0 : index
    %165 = vector.load %arg8[%c0_91, %c0_92] : memref<4x256xf32, #tpu.memory_space<vmem>>, vector<4x256xf32>
    tpu.vector_store %arg8[%c0_91, %c0_92], %164 {strides = array<i32>} : memref<4x256xf32, #tpu.memory_space<vmem>>, vector<4x256xf32>,
    %c1_i32_93 = arith.constant 1 : i32
    %166 = arith.cmpi eq, %arg1, %c1_i32_93 : i32
    %167 = arith.extui %166 : i1 to i32
    %c0_i32_94 = arith.constant 0 : i32
    %168 = arith.cmpi ne, %167, %c0_i32_94 : i32
    scf.if %168 {
      %c0_95 = arith.constant 0 : index
      %c0_96 = arith.constant 0 : index
      %c0_97 = arith.constant 0 : index
      %169 = vector.load %arg7[%c0_95, %c0_96, %c0_97] : memref<1x4x256xf32, #tpu.memory_space<vmem>>, vector<1x4x256xf32>
      %170 = vector.shape_cast %169 : vector<1x4x256xf32> to vector<4x256xf32>
      %171 = vector.shape_cast %164 : vector<4x256xf32> to vector<1x4x256xf32>
      tpu.vector_store %arg7[%c0_95, %c0_96, %c0_97], %171 {strides = array<i32>} : memref<1x4x256xf32, #tpu.memory_space<vmem>>, vector<1x4x256xf32>,
    } else {
    }
    return
  }
  func.func @transform_0(%arg0: i32, %arg1: i32) -> (i32, i32, i32) {
    %c0_i32 = arith.constant 0 : i32
    %c0_i32_0 = arith.constant 0 : i32
    %c0_i32_1 = arith.constant 0 : i32
    return %arg0, %c0_i32, %c0_i32_0 : i32, i32, i32
  }
  func.func @transform_1(%arg0: i32, %arg1: i32) -> (i32, i32) {
    %c0_i32 = arith.constant 0 : i32
    %c0_i32_0 = arith.constant 0 : i32
    %c0_i32_1 = arith.constant 0 : i32
    return %c0_i32, %c0_i32_0 : i32, i32
  }
  func.func @transform_2(%arg0: i32, %arg1: i32) -> (i32, i32, i32, i32) {
    %c0_i32 = arith.constant 0 : i32
    %c0_i32_0 = arith.constant 0 : i32
    %c0_i32_1 = arith.constant 0 : i32
    %c0_i32_2 = arith.constant 0 : i32
    return %arg1, %c0_i32, %c0_i32_0, %c0_i32_1 : i32, i32, i32, i32
  }
  func.func @transform_3(%arg0: i32, %arg1: i32) -> (i32, i32, i32, i32) {
    %c0_i32 = arith.constant 0 : i32
    %c0_i32_0 = arith.constant 0 : i32
    %c0_i32_1 = arith.constant 0 : i32
    %c0_i32_2 = arith.constant 0 : i32
    return %arg1, %c0_i32, %c0_i32_0, %c0_i32_1 : i32, i32, i32, i32
  }
  func.func @transform_4(%arg0: i32, %arg1: i32) -> (i32, i32, i32, i32) {
    %c0_i32 = arith.constant 0 : i32
    %c0_i32_0 = arith.constant 0 : i32
    %c0_i32_1 = arith.constant 0 : i32
    %c0_i32_2 = arith.constant 0 : i32
    return %arg1, %c0_i32, %c0_i32_0, %c0_i32_1 : i32, i32, i32, i32
  }
  func.func @transform_5(%arg0: i32, %arg1: i32) -> (i32, i32, i32) {
    %c0_i32 = arith.constant 0 : i32
    %c0_i32_0 = arith.constant 0 : i32
    %c0_i32_1 = arith.constant 0 : i32
    return %arg0, %c0_i32, %c0_i32_0 : i32, i32, i32
  }
}

</mosaic_0001>

<llo_original>
// kernel: res_block_forward.1
$region0: #{res_block_forward.1}
  #allocation0 [shape = 'u32[]', space=smem, size = 0x4, offset = 0x4, fixed_abs, tag = 'smem constant byte address 0x4 - core index']
  #allocation1 [shape = 'u32[144,128]{1,0:T(1,128)}', space=vmem, size = 0x12000, scoped, tag = 'internal scratch']
  #allocation2 [shape = 'f32[4,256]{1,0:T(4,128)}', space=vmem, size = 0x1000, scoped, tag = 'scratch operand']
  #allocation3 [shape = 'f32[36,256]{1,0:T(8,128)}', space=vmem, size = 0xa000, scoped, tag = 'scratch operand']
  %s0 = inlined_call_operand.vmem [shape: f32[2,4,256], index: 0, kind: input, shape index: {}]
  %s1 = inlined_call_operand.vmem [shape: s32[2,256], index: 1, kind: input, shape index: {}]
  %s2 = inlined_call_operand.vmem [shape: f32[2,2,4,36], index: 2, kind: input, shape index: {}]
  %s3 = inlined_call_operand.vmem [shape: f32[2,2,4,1], index: 3, kind: input, shape index: {}]
  %s4 = inlined_call_operand.vmem [shape: f32[2,2,4,1], index: 4, kind: input, shape index: {}]
  %s5 = inlined_call_operand.vmem [shape: f32[2,4,256], index: 5, kind: output, shape index: {}]
  %s6 = sld [smem:[#allocation0]]
  $region61: #{res_block_forward.1} parent=0
    _
  %s8 = ssub.s32 1, %s6
  %s9 = scalar_select 0, %s8, %s6
  loop: start=0, step=1, limit=6
  $region2: #{res_block_forward.1} parent=0 // loop_pre_header
    _
  $region3: #{res_block_forward.1} parent=0 // loop_header
    %s11 = sphi 0, %s15
    %p12 = scmp.ge.s32.totalorder %s11, 6
    %s18 = sphi 0, %s30
    %s19 = sphi 0, %s26
    %s20 = sphi 0, %s18
    %s21 = sphi 0, %s19
    %s22 = sphi 0, %s20
    %s23 = sphi 0, %s21
    %s33 = sphi 0, %s35
    %s36 = sphi 0, %s33
    %s37 = sphi 0, %s36
    %s53 = sphi 0, %s37
    %s57 = sphi 0, %s57
    %s59 = sphi 0, %s57
    %s60 = sphi 0, %s59
    %s74 = sphi 0, %s60
    %s80 = sphi 0, %s82
    %s83 = sphi 0, %s80
    %s84 = sphi 0, %s83
    %s100 = sphi 0, %s84
    %s106 = sphi 0, %s108
    %s109 = sphi 0, %s106
    %s110 = sphi 0, %s109
    %s126 = sphi 0, %s110
    %s132 = sphi 0, %s134
    %s135 = sphi 0, %s132
    %s136 = sphi 0, %s135
    %s152 = sphi 0, %s136
    %s158 = sphi 0, %s160
    %s161 = sphi 0, %s158
    %s162 = sphi 0, %s161
    %s178 = sphi 0, %s162
  $region4: #{res_block_forward.1} parent=0 // loop_header_branch
    %14 = sbr.rel (%p12) target = $region8
  $region5: #{res_block_forward.1} parent=0 // loop_body
    %s16 = ssub.s32 %s11, 1
    %s17 = ssub.s32 %s11, 2
    %s24 = sadd.s32 1, %s19
    %p25 = scmp.ge.s32.totalorder %s24, 2
    %s26 = scalar_select %p25, 0, %s24
    %s27 = sadd.s32 1, %s18
    %s28 = scalar_select %p25, %s27, %s18
    %p29 = scmp.ge.s32.totalorder %s28, 2
    %s30 = scalar_select %p29, 0, %s28
    %s31 = ssub.s32 %s18, %s30
    %p32 = scmp.eq.s32.totalorder %s31, 0
    %s34 = sadd.s32 %s33, 1
    %s35 = scalar_select %p32, %s33, %s34
    %p38 = pneg %p32
    %p39 = scmp.eq.s32.totalorder %s11, 3
    %p40 = por %p38, %p39
    %p41 = scmp.ne.s32.totalorder %s33, %s36
    %p42 = scmp.eq.s32.totalorder %s11, 0
    %p43 = por %p41, %p42
    %p44 = scmp.ne.s32.totalorder %s33, %s36
    %p45 = scmp.eq.s32.totalorder %s16, 3
    %p46 = por %p44, %p45
    %p47 = scmp.ne.s32.totalorder %s36, %s37
    %p48 = scmp.eq.s32.totalorder %s16, 0
    %p49 = por %p47, %p48
    %p50 = scmp.ne.s32.totalorder %s36, %s37
    %p51 = scmp.eq.s32.totalorder %s17, 3
    %p52 = por %p50, %p51
    %p54 = scmp.ne.s32.totalorder %s37, %s53
    %p55 = scmp.eq.s32.totalorder %s17, 0
    %p56 = por %p54, %p55
    %s58 = sadd.s32 %s57, 1
    %p61 = scmp.eq.s32.totalorder %s11, 3
    %p62 = scmp.ne.s32.totalorder %s57, %s59
    %p63 = scmp.eq.s32.totalorder %s11, 0
    %p64 = por %p62, %p63
    %p65 = scmp.ne.s32.totalorder %s57, %s59
    %p66 = scmp.eq.s32.totalorder %s16, 3
    %p67 = por %p65, %p66
    %p68 = scmp.ne.s32.totalorder %s59, %s60
    %p69 = scmp.eq.s32.totalorder %s16, 0
    %p70 = por %p68, %p69
    %p71 = scmp.ne.s32.totalorder %s59, %s60
    %p72 = scmp.eq.s32.totalorder %s17, 3
    %p73 = por %p71, %p72
    %p75 = scmp.ne.s32.totalorder %s60, %s74
    %p76 = scmp.eq.s32.totalorder %s17, 0
    %p77 = por %p75, %p76
    %s78 = ssub.s32 %s19, %s26
    %p79 = scmp.eq.s32.totalorder %s78, 0
    %s81 = sadd.s32 %s80, 1
    %s82 = scalar_select %p79, %s80, %s81
    %p85 = pneg %p79
    %p86 = scmp.eq.s32.totalorder %s11, 3
    %p87 = por %p85, %p86
    %p88 = scmp.ne.s32.totalorder %s80, %s83
    %p89 = scmp.eq.s32.totalorder %s11, 0
    %p90 = por %p88, %p89
    %p91 = scmp.ne.s32.totalorder %s80, %s83
    %p92 = scmp.eq.s32.totalorder %s16, 3
    %p93 = por %p91, %p92
    %p94 = scmp.ne.s32.totalorder %s83, %s84
    %p95 = scmp.eq.s32.totalorder %s16, 0
    %p96 = por %p94, %p95
    %p97 = scmp.ne.s32.totalorder %s83, %s84
    %p98 = scmp.eq.s32.totalorder %s17, 3
    %p99 = por %p97, %p98
    %p101 = scmp.ne.s32.totalorder %s84, %s100
    %p102 = scmp.eq.s32.totalorder %s17, 0
    %p103 = por %p101, %p102
    %s104 = ssub.s32 %s19, %s26
    %p105 = scmp.eq.s32.totalorder %s104, 0
    %s107 = sadd.s32 %s106, 1
    %s108 = scalar_select %p105, %s106, %s107
    %p111 = pneg %p105
    %p112 = scmp.eq.s32.totalorder %s11, 3
    %p113 = por %p111, %p112
    %p114 = scmp.ne.s32.totalorder %s106, %s109
    %p115 = scmp.eq.s32.totalorder %s11, 0
    %p116 = por %p114, %p115
    %p117 = scmp.ne.s32.totalorder %s106, %s109
    %p118 = scmp.eq.s32.totalorder %s16, 3
    %p119 = por %p117, %p118
    %p120 = scmp.ne.s32.totalorder %s109, %s110
    %p121 = scmp.eq.s32.totalorder %s16, 0
    %p122 = por %p120, %p121
    %p123 = scmp.ne.s32.totalorder %s109, %s110
    %p124 = scmp.eq.s32.totalorder %s17, 3
    %p125 = por %p123, %p124
    %p127 = scmp.ne.s32.totalorder %s110, %s126
    %p128 = scmp.eq.s32.totalorder %s17, 0
    %p129 = por %p127, %p128
    %s130 = ssub.s32 %s19, %s26
    %p131 = scmp.eq.s32.totalorder %s130, 0
    %s133 = sadd.s32 %s132, 1
    %s134 = scalar_select %p131, %s132, %s133
    %p137 = pneg %p131
    %p138 = scmp.eq.s32.totalorder %s11, 3
    %p139 = por %p137, %p138
    %p140 = scmp.ne.s32.totalorder %s132, %s135
    %p141 = scmp.eq.s32.totalorder %s11, 0
    %p142 = por %p140, %p141
    %p143 = scmp.ne.s32.totalorder %s132, %s135
    %p144 = scmp.eq.s32.totalorder %s16, 3
    %p145 = por %p143, %p144
    %p146 = scmp.ne.s32.totalorder %s135, %s136
    %p147 = scmp.eq.s32.totalorder %s16, 0
    %p148 = por %p146, %p147
    %p149 = scmp.ne.s32.totalorder %s135, %s136
    %p150 = scmp.eq.s32.totalorder %s17, 3
    %p151 = por %p149, %p150
    %p153 = scmp.ne.s32.totalorder %s136, %s152
    %p154 = scmp.eq.s32.totalorder %s17, 0
    %p155 = por %p153, %p154
    %s156 = ssub.s32 %s18, %s30
    %p157 = scmp.eq.s32.totalorder %s156, 0
    %s159 = sadd.s32 %s158, 1
    %s160 = scalar_select %p157, %s158, %s159
    %p163 = pneg %p157
    %p164 = scmp.eq.s32.totalorder %s11, 3
    %p165 = por %p163, %p164
    %p166 = scmp.ne.s32.totalorder %s158, %s161
    %p167 = scmp.eq.s32.totalorder %s11, 0
    %p168 = por %p166, %p167
    %p169 = scmp.ne.s32.totalorder %s158, %s161
    %p170 = scmp.eq.s32.totalorder %s16, 3
    %p171 = por %p169, %p170
    %p172 = scmp.ne.s32.totalorder %s161, %s162
    %p173 = scmp.eq.s32.totalorder %s16, 0
    %p174 = por %p172, %p173
    %p175 = scmp.ne.s32.totalorder %s161, %s162
    %p176 = scmp.eq.s32.totalorder %s17, 3
    %p177 = por %p175, %p176
    %p179 = scmp.ne.s32.totalorder %s162, %s178
    %p180 = scmp.eq.s32.totalorder %s17, 0
    %p181 = por %p179, %p180
    %p182 = scmp.le.s32.totalorder 1, %s11
    %p183 = scmp.lt.s32.totalorder %s11, 5
    %p184 = pnand %p182, %p183
    %p185 = pneg %p184
    // Predicated region
    $region9: #{res_block_forward.1} parent=5 // pred_check
      _
    $region10: #{res_block_forward.1} parent=5 // pred_check_branch
      %187 = sbr.rel (%p184) target = $region12
    $region11: #{res_block_forward.1} parent=5 // pred_region
      %s188 = ssub.s32 %s11, 1
      // Predicated region
      $region13: #{res_block_forward.1} parent=11 // pred_check
        %p189 = pneg %p70
      $region14: #{res_block_forward.1} parent=11 // pred_check_branch
        %191 = sbr.rel (%p189) target = $region16
      $region15: #{res_block_forward.1} parent=11 // pred_region
        _
      $region16: #{res_block_forward.1} parent=11 // pred_fallthru
        _
    $region12: #{res_block_forward.1} parent=5 // pred_fallthru
      _
    %p192 = scmp.lt.s32.totalorder %s11, 4
    // Predicated region
    $region17: #{res_block_forward.1} parent=5 // pred_check
      %p193 = pneg %p192
    $region18: #{res_block_forward.1} parent=5 // pred_check_branch
      %195 = sbr.rel (%p193) target = $region20
    $region19: #{res_block_forward.1} parent=5 // pred_region
      // Predicated region
      $region21: #{res_block_forward.1} parent=19 // pred_check
        %p196 = pneg %p43
      $region22: #{res_block_forward.1} parent=19 // pred_check_branch
        %198 = sbr.rel (%p196) target = $region24
      $region23: #{res_block_forward.1} parent=19 // pred_region
        %p199 = scmp.lt.s32.totalorder %s18, 1
        %s200 = scalar_select %p199, %s18, 1
        %s201 = smul.addr %s200, 2
        %s202 = smul.addr %s201, 4
        %s203 = scalar_lea.vmem %s0, %s202
      $region24: #{res_block_forward.1} parent=19 // pred_fallthru
        _
      // Predicated region
      $region25: #{res_block_forward.1} parent=19 // pred_check
        %p204 = pneg %p90
      $region26: #{res_block_forward.1} parent=19 // pred_check_branch
        %206 = sbr.rel (%p204) target = $region28
      $region27: #{res_block_forward.1} parent=19 // pred_region
        %p207 = scmp.lt.s32.totalorder %s19, 1
        %s208 = scalar_select %p207, %s19, 1
        %s209 = smul.addr %s208, 2
        %s210 = smul.addr %s209, 4
        %s211 = scalar_lea.vmem %s2, %s210
      $region28: #{res_block_forward.1} parent=19 // pred_fallthru
        _
      // Predicated region
      $region29: #{res_block_forward.1} parent=19 // pred_check
        %p212 = pneg %p116
      $region30: #{res_block_forward.1} parent=19 // pred_check_branch
        %214 = sbr.rel (%p212) target = $region32
      $region31: #{res_block_forward.1} parent=19 // pred_region
        %p215 = scmp.lt.s32.totalorder %s19, 1
        %s216 = scalar_select %p215, %s19, 1
        %s217 = smul.addr %s216, 2
        %s218 = smul.addr %s217, 4
        %s219 = scalar_lea.vmem %s3, %s218
      $region32: #{res_block_forward.1} parent=19 // pred_fallthru
        _
      // Predicated region
      $region33: #{res_block_forward.1} parent=19 // pred_check
        %p220 = pneg %p142
      $region34: #{res_block_forward.1} parent=19 // pred_check_branch
        %222 = sbr.rel (%p220) target = $region36
      $region35: #{res_block_forward.1} parent=19 // pred_region
        %p223 = scmp.lt.s32.totalorder %s19, 1
        %s224 = scalar_select %p223, %s19, 1
        %s225 = smul.addr %s224, 2
        %s226 = smul.addr %s225, 4
        %s227 = scalar_lea.vmem %s4, %s226
      $region36: #{res_block_forward.1} parent=19 // pred_fallthru
        _
    $region20: #{res_block_forward.1} parent=5 // pred_fallthru
      _
    %p228 = scmp.le.s32.totalorder 1, %s11
    %p229 = scmp.lt.s32.totalorder %s11, 5
    %p230 = pnand %p228, %p229
    %p231 = pneg %p230
    // Predicated region
    $region37: #{res_block_forward.1} parent=5 // pred_check
      _
    $region38: #{res_block_forward.1} parent=5 // pred_check_branch
      %233 = sbr.rel (%p230) target = $region40
    $region39: #{res_block_forward.1} parent=5 // pred_region
      %s234 = ssub.s32 %s11, 1
      %p235 = scmp.lt.s32.totalorder %s20, 1
      %s236 = scalar_select %p235, %s20, 1
      %s237 = smul.addr %s236, 2
      %s238 = smul.addr %s237, 4
      %s239 = scalar_lea.vmem %s0, %s238
      %p240 = pneg %p49
      %p241 = pneg %p46
      %p242 = pneg %p70
      %p243 = pneg %p67
      %p244 = scmp.lt.s32.totalorder %s21, 1
      %s245 = scalar_select %p244, %s21, 1
      %s246 = smul.addr %s245, 2
      %s247 = smul.addr %s246, 4
      %s248 = scalar_lea.vmem %s2, %s247
      %p249 = pneg %p96
      %p250 = pneg %p93
      %p251 = scmp.lt.s32.totalorder %s21, 1
      %s252 = scalar_select %p251, %s21, 1
      %s253 = smul.addr %s252, 2
      %s254 = smul.addr %s253, 4
      %s255 = scalar_lea.vmem %s3, %s254
      %p256 = pneg %p122
      %p257 = pneg %p119
      %p258 = scmp.lt.s32.totalorder %s21, 1
      %s259 = scalar_select %p258, %s21, 1
      %s260 = smul.addr %s259, 2
      %s261 = smul.addr %s260, 4
      %s262 = scalar_lea.vmem %s4, %s261
      %p263 = pneg %p148
      %p264 = pneg %p145
      %p265 = pneg %p174
      %p266 = pneg %p171
      %p267 = scmp.lt.s32.totalorder %s20, 1
      %s268 = scalar_select %p267, %s20, 1
      %s269 = smul.addr %s268, 2
      %s270 = smul.addr %s269, 4
      %s271 = scalar_lea.vmem %s5, %s270
      %p272 = scmp.lt.s32.totalorder %s20, 1
      %s273 = scalar_select %p272, %s20, 1
      %s274 = smul.addr %s273, 2
      %s275 = smul.addr %s274, 4
      %s276 = scalar_lea.vmem %s0, %s275
      %p277 = scmp.lt.s32.totalorder %s21, 1
      %s278 = scalar_select %p277, %s21, 1
      %s279 = smul.addr %s278, 2
      %s280 = smul.addr %s279, 4
      %s281 = scalar_lea.vmem %s2, %s280
      %p282 = scmp.lt.s32.totalorder %s21, 1
      %s283 = scalar_select %p282, %s21, 1
      %s284 = smul.addr %s283, 2
      %s285 = smul.addr %s284, 4
      %s286 = scalar_lea.vmem %s3, %s285
      %p287 = scmp.lt.s32.totalorder %s21, 1
      %s288 = scalar_select %p287, %s21, 1
      %s289 = smul.addr %s288, 2
      %s290 = smul.addr %s289, 4
      %s291 = scalar_lea.vmem %s4, %s290
      %p292 = scmp.lt.s32.totalorder %s20, 1
      %s293 = scalar_select %p292, %s20, 1
      %s294 = smul.addr %s293, 2
      %s295 = smul.addr %s294, 4
      %s296 = scalar_lea.vmem %s5, %s295
      %p297 = scmp.eq.s32.totalorder %s21, 0
      // Predicated region
      $region41: #{res_block_forward.1} parent=39 // pred_check
        %p298 = pneg %p297
      $region42: #{res_block_forward.1} parent=39 // pred_check_branch
        %300 = sbr.rel (%p298) target = $region44
      $region43: #{res_block_forward.1} parent=39 // pred_region
        %v301 = vld [vmem:[%s276] sm:$0xff]
        %302 = vst [vmem:[#allocation2] sm:$0xff] %v301
      $region44: #{res_block_forward.1} parent=39 // pred_fallthru
        _
      %v303 = vld [vmem:[%s1] ss:$2 sm:$0x3]
      %s304 = scalar_lea.vmem %s1, 1
      %v305 = vld [vmem:[%s304] ss:$2 sm:$0x3]
      %vm306 = vcmp.eq.s32.totalorder %v303, 0
      %vm307 = vcmp.eq.s32.totalorder %v303, 15
      %vm308 = vcmp.eq.s32.totalorder %v305, 0
      %vm309 = vcmp.eq.s32.totalorder %v305, 15
      %v310 = vld [vmem:[#allocation2] sm:$0xff]
      %v312 = vcombine.high %v310, %v310
      %314 = vrot.lane.b32.xlu0 %v310, 16
      %v315 = vpop.permute.xlu0 %314
      %316 = vrot.lane.b32.xlu0 %v312, 16
      %v317 = vpop.permute.xlu0 %316
      %v318 = vlaneseq
      %v319 = vand.u32 %v318, 127
      %vm320 = vcmp.lt.s32.totalorder %v319, 16
      %v321 = vsel %vm320, %v315, %v317
      %v322 = vsel %vm320, %v317, %v315
      %323 = vrot.lane.b32.xlu0 %v310, 112
      %v324 = vpop.permute.xlu0 %323
      %325 = vrot.lane.b32.xlu0 %v312, 112
      %v326 = vpop.permute.xlu0 %325
      %vm327 = vcmp.lt.s32.totalorder %v319, 112
      %v328 = vsel %vm327, %v324, %v326
      %v329 = vsel %vm327, %v326, %v324
      %v330 = vsel %vm306, 1, 0
      %v331 = vlaneseq
      %v332 = vshrl.u32 %v331, 7
      %v333 = vsub.s32 0, %v332
      %v334 = vrot.slane %v330, %v333
      %v335 = vlaneseq
      %v336 = vshrl.u32 %v335, 7
      %v337 = vsub.s32 1, %v336
      %v338 = vrot.slane %v330, %v337
      %vm339 = vcmp.eq.s32.totalorder %v334, 1
      %vm340 = vcmp.eq.s32.totalorder %v338, 1
      %v341 = vsel %vm339, %v328, %v322
      %v342 = vsel %vm340, %v329, %v321
      %v343 = vsel %vm307, 1, 0
      %v344 = vlaneseq
      %v345 = vshrl.u32 %v344, 7
      %v346 = vsub.s32 0, %v345
      %v347 = vrot.slane %v343, %v346
      %v348 = vlaneseq
      %v349 = vshrl.u32 %v348, 7
      %v350 = vsub.s32 1, %v349
      %v351 = vrot.slane %v343, %v350
      %vm352 = vcmp.eq.s32.totalorder %v347, 1
      %vm353 = vcmp.eq.s32.totalorder %v351, 1
      %v354 = vsel %vm352, %v322, %v328
      %v355 = vsel %vm353, %v321, %v329
      %356 = vrot.lane.b32.xlu0 %v341, 1
      %v357 = vpop.permute.xlu0 %356
      %358 = vrot.lane.b32.xlu0 %v342, 1
      %v359 = vpop.permute.xlu0 %358
      %vm360 = vcmp.lt.s32.totalorder %v319, 1
      %v361 = vsel %vm360, %v357, %v359
      %v362 = vsel %vm360, %v359, %v357
      %363 = vrot.lane.b32.xlu0 %v341, 127
      %v364 = vpop.permute.xlu0 %363
      %365 = vrot.lane.b32.xlu0 %v342, 127
      %v366 = vpop.permute.xlu0 %365
      %vm367 = vcmp.lt.s32.totalorder %v319, 127
      %v368 = vsel %vm367, %v364, %v366
      %v369 = vsel %vm367, %v366, %v364
      %v370 = vsel %vm308, 1, 0
      %v371 = vlaneseq
      %v372 = vshrl.u32 %v371, 7
      %v373 = vsub.s32 0, %v372
      %v374 = vrot.slane %v370, %v373
      %v375 = vlaneseq
      %v376 = vshrl.u32 %v375, 7
      %v377 = vsub.s32 1, %v376
      %v378 = vrot.slane %v370, %v377
      %vm379 = vcmp.eq.s32.totalorder %v374, 1
      %vm380 = vcmp.eq.s32.totalorder %v378, 1
      %v381 = vsel %vm379, %v368, %v362
      %v382 = vsel %vm380, %v369, %v361
      %v383 = vsel %vm309, 1, 0
      %v384 = vlaneseq
      %v385 = vshrl.u32 %v384, 7
      %v386 = vsub.s32 0, %v385
      %v387 = vrot.slane %v383, %v386
      %v388 = vlaneseq
      %v389 = vshrl.u32 %v388, 7
      %v390 = vsub.s32 1, %v389
      %v391 = vrot.slane %v383, %v390
      %vm392 = vcmp.eq.s32.totalorder %v387, 1
      %vm393 = vcmp.eq.s32.totalorder %v391, 1
      %v394 = vsel %vm392, %v362, %v368
      %v395 = vsel %vm393, %v361, %v369
      %396 = vst [vmem:[#allocation3] sm:$0xf] %v381
      %397 = vst [vmem:[#allocation3 + $0x8] sm:$0xf] %v382
      %v400 = vrot.slane %v341, 4
      %v401 = vrot.slane %v342, 4
      %404 = vst [vmem:[#allocation3] sm:$0xf0] %v400
      %405 = vst [vmem:[#allocation3 + $0x8] sm:$0xf0] %v401
      %406 = vst [vmem:[#allocation3 + $0x10] sm:$0xf] %v394
      %407 = vst [vmem:[#allocation3 + $0x18] sm:$0xf] %v395
      %408 = vrot.lane.b32.xlu0 %v310, 1
      %v409 = vpop.permute.xlu0 %408
      %410 = vrot.lane.b32.xlu0 %v312, 1
      %v411 = vpop.permute.xlu0 %410
      %v412 = vsel %vm360, %v409, %v411
      %v413 = vsel %vm360, %v411, %v409
      %414 = vrot.lane.b32.xlu0 %v310, 127
      %v415 = vpop.permute.xlu0 %414
      %416 = vrot.lane.b32.xlu0 %v312, 127
      %v417 = vpop.permute.xlu0 %416
      %v418 = vsel %vm367, %v415, %v417
      %v419 = vsel %vm367, %v417, %v415
      %v420 = vsel %vm379, %v418, %v413
      %v421 = vsel %vm380, %v419, %v412
      %v422 = vsel %vm392, %v413, %v418
      %v423 = vsel %vm393, %v412, %v419
      %v426 = vrot.slane %v420, 4
      %v427 = vrot.slane %v421, 4
      %430 = vst [vmem:[#allocation3 + $0x10] sm:$0xf0] %v426
      %431 = vst [vmem:[#allocation3 + $0x18] sm:$0xf0] %v427
      %432 = vst [vmem:[#allocation3 + $0x20] sm:$0xf] %v310
      %433 = vst [vmem:[#allocation3 + $0x28] sm:$0xf] %v312
      %v436 = vrot.slane %v422, 4
      %v437 = vrot.slane %v423, 4
      %440 = vst [vmem:[#allocation3 + $0x20] sm:$0xf0] %v436
      %441 = vst [vmem:[#allocation3 + $0x28] sm:$0xf0] %v437
      %442 = vrot.lane.b32.xlu0 %v354, 1
      %v443 = vpop.permute.xlu0 %442
      %444 = vrot.lane.b32.xlu0 %v355, 1
      %v445 = vpop.permute.xlu0 %444
      %v446 = vsel %vm360, %v443, %v445
      %v447 = vsel %vm360, %v445, %v443
      %448 = vrot.lane.b32.xlu0 %v354, 127
      %v449 = vpop.permute.xlu0 %448
      %450 = vrot.lane.b32.xlu0 %v355, 127
      %v451 = vpop.permute.xlu0 %450
      %v452 = vsel %vm367, %v449, %v451
      %v453 = vsel %vm367, %v451, %v449
      %v454 = vsel %vm379, %v452, %v447
      %v455 = vsel %vm380, %v453, %v446
      %v456 = vsel %vm392, %v447, %v452
      %v457 = vsel %vm393, %v446, %v453
      %458 = vst [vmem:[#allocation3 + $0x30] sm:$0xf] %v454
      %459 = vst [vmem:[#allocation3 + $0x38] sm:$0xf] %v455
      %v462 = vrot.slane %v354, 4
      %v463 = vrot.slane %v355, 4
      %466 = vst [vmem:[#allocation3 + $0x30] sm:$0xf0] %v462
      %467 = vst [vmem:[#allocation3 + $0x38] sm:$0xf0] %v463
      %468 = vst [vmem:[#allocation3 + $0x40] sm:$0xf] %v456
      %469 = vst [vmem:[#allocation3 + $0x48] sm:$0xf] %v457
      %v470 = vld [vmem:[%s281] sm:$0xf]
      %v471 = vld [vmem:[#allocation3] sm:$0xff]
      %v472 = vld [vmem:[#allocation3 + $0x8] sm:$0xff]
      %v473 = vld [vmem:[#allocation3 + $0x10] sm:$0xff]
      %v474 = vld [vmem:[#allocation3 + $0x18] sm:$0xff]
      %v475 = vld [vmem:[#allocation3 + $0x20] sm:$0xff]
      %v476 = vld [vmem:[#allocation3 + $0x28] sm:$0xff]
      %v477 = vld [vmem:[#allocation3 + $0x30] sm:$0xff]
      %v478 = vld [vmem:[#allocation3 + $0x38] sm:$0xff]
      %v479 = vld [vmem:[#allocation3 + $0x40] sm:$0xf]
      %v480 = vld [vmem:[#allocation3 + $0x48] sm:$0xf]
      %vm481 = vcmask 293888
      %v483 = vsel %vm481, %v470, 0
      %vm485 = vcmask 1043456
      %v487 = vsel %vm485, %v479, 0
      %v490 = vsel %vm485, %v480, 0
      %492 = vmatprep.subr.mxu0 0.0
      %493 = vmatpush1.msra.mxu0 0.0
      %494 = vmatprep.subr.mxu0 0.0
      %495 = vmatpush1.msra.mxu0 0.0
      %496 = vmatprep.subr.mxu0 0.0
      %497 = vmatpush1.msra.mxu0 0.0
      %498 = vmatprep.subr.mxu0 0.0
      %499 = vmatpush1.msra.mxu0 0.0
      %500 = vmatprep.subr.mxu0 0.0
      %501 = vmatpush1.msra.mxu0 0.0
      %502 = vmatprep.subr.mxu0 0.0
      %503 = vmatpush1.msra.mxu0 0.0
      %504 = vmatprep.subr.mxu0 0.0
      %505 = vmatpush1.msra.mxu0 0.0
      %506 = vmatprep.subr.mxu0 0.0
      %507 = vmatpush1.msra.mxu0 0.0
      %508 = vmatprep.subr.mxu0 0.0
      %509 = vmatpush1.msra.mxu0 0.0
      %510 = vmatprep.subr.mxu0 0.0
      %511 = vmatpush1.msra.mxu0 0.0
      %512 = vmatprep.subr.mxu0 0.0
      %513 = vmatpush1.msra.mxu0 0.0
      %514 = vmatprep.subr.mxu0 %v490
      %515 = vmatpush1.msra.mxu0 %v487
      %516 = vmatprep.subr.mxu0 %v478
      %517 = vmatpush1.msra.mxu0 %v477
      %518 = vmatprep.subr.mxu0 %v476
      %519 = vmatpush1.msra.mxu0 %v475
      %520 = vmatprep.subr.mxu0 %v474
      %521 = vmatpush1.msra.mxu0 %v473
      %522 = vmatprep.subr.mxu0 %v472
      %523 = vmatpush1.msra.mxu0 %v471
      %524 = vmatprep.subr.mxu0 0.0
      %525 = vmatpush2.msra.mxu0 0.0
      %526 = vmatprep.subr.mxu0 0.0
      %527 = vmatpush2.msra.mxu0 0.0
      %528 = vmatprep.subr.mxu0 0.0
      %529 = vmatpush2.msra.mxu0 0.0
      %530 = vmatprep.subr.mxu0 0.0
      %531 = vmatpush2.msra.mxu0 0.0
      %532 = vmatprep.subr.mxu0 0.0
      %533 = vmatpush2.msra.mxu0 0.0
      %534 = vmatprep.subr.mxu0 0.0
      %535 = vmatpush2.msra.mxu0 0.0
      %536 = vmatprep.subr.mxu0 0.0
      %537 = vmatpush2.msra.mxu0 0.0
      %538 = vmatprep.subr.mxu0 0.0
      %539 = vmatpush2.msra.mxu0 0.0
      %540 = vmatprep.subr.mxu0 0.0
      %541 = vmatpush2.msra.mxu0 0.0
      %542 = vmatprep.subr.mxu0 0.0
      %543 = vmatpush2.msra.mxu0 0.0
      %544 = vmatprep.subr.mxu0 0.0
      %545 = vmatpush2.msra.mxu0 0.0
      %546 = vmatprep.subr.mxu0 0.0
      %547 = vmatpush2.msra.mxu0 0.0
      %548 = vmatprep.subr.mxu0 0.0
      %549 = vmatpush2.msra.mxu0 0.0
      %550 = vmatprep.subr.mxu0 0.0
      %551 = vmatpush2.msra.mxu0 0.0
      %552 = vmatprep.subr.mxu0 0.0
      %553 = vmatpush2.msra.mxu0 0.0
      %554 = vmatprep.subr.mxu0 0.0
      %555 = vmatpush2.msra.mxu0 0.0
      %556 = vmatprep.mubr.f32.mxu0 0.0
      %557 = vmatmul.mubr.f32.gmra.mxu0 %v483
      %v558 = vpop.f32.mrf.mxu0
      %v559 = vadd.f32 0.0, %v558
      %v560 = vpop.f32.mrf.mxu0
      %v561 = vadd.f32 0.0, %v560
      %562 = vdwg.mxu0
      %v563 = vld [vmem:[%s286] sm:$0xf]
      %565 = vset.pattern.permute.xlu0 0
      %566 = vperm.xlu0 %565, %v563
      %v567 = vpop.permute.xlu0 %566
      %v569 = vmul.f32 %v559, %v567
      %v570 = vmul.f32 %v561, %v567
      %v571 = vld [vmem:[%s291] sm:$0xf]
      %573 = vset.pattern.permute.xlu0 0
      %574 = vperm.xlu0 %573, %v571
      %v575 = vpop.permute.xlu0 %574
      %v577 = vadd.f32 %v569, %v575
      %v578 = vadd.f32 %v570, %v575
      %v579 = vmul.f32 %v577, 0.3
      %v580 = vmul.f32 %v578, 0.3
      %v581 = vmax.f32 %v577, %v579
      %v582 = vmax.f32 %v578, %v580
      %v583 = vmin.f32 %v581, 20.0
      %v584 = vmin.f32 %v582, 20.0
      %v585 = vmul.f32 %v583, 1.442695
      %v586 = vpow.pop %v585
      %v587 = vmul.f32 %v584, 1.442695
      %v588 = vpow.pop %v587
      %v589 = vadd.f32 %v586, 1.0
      %v590 = vadd.f32 %v588, 1.0
      %v591 = vmul.f32 %v589, %v589
      %v592 = vmul.f32 %v590, %v590
      %v593 = vadd.f32 %v591, 1.0
      %v594 = vadd.f32 %v592, 1.0
      %v595 = vrcp.pop %v593
      %v596 = vrcp.pop %v594
      %v597 = vmul.f32 %v593, %v595
      %v598 = vmul.f32 %v594, %v596
      %v599 = vsub.f32 2.0, %v597
      %v600 = vsub.f32 2.0, %v598
      %v601 = vmul.f32 %v595, %v599
      %v602 = vmul.f32 %v596, %v600
      %v603 = vsub.f32 %v591, 1.0
      %v604 = vsub.f32 %v592, 1.0
      %v605 = vmul.f32 %v581, %v603
      %v606 = vmul.f32 %v582, %v604
      %v607 = vmul.f32 %v605, %v601
      %v608 = vmul.f32 %v606, %v602
      %609 = vrot.lane.b32.xlu0 %v607, 16
      %v610 = vpop.permute.xlu0 %609
      %611 = vrot.lane.b32.xlu0 %v608, 16
      %v612 = vpop.permute.xlu0 %611
      %v613 = vsel %vm320, %v610, %v612
      %v614 = vsel %vm320, %v612, %v610
      %615 = vrot.lane.b32.xlu0 %v607, 112
      %v616 = vpop.permute.xlu0 %615
      %617 = vrot.lane.b32.xlu0 %v608, 112
      %v618 = vpop.permute.xlu0 %617
      %v619 = vsel %vm327, %v616, %v618
      %v620 = vsel %vm327, %v618, %v616
      %v621 = vsel %vm339, %v619, %v614
      %v622 = vsel %vm340, %v620, %v613
      %v623 = vsel %vm352, %v614, %v619
      %v624 = vsel %vm353, %v613, %v620
      %625 = vrot.lane.b32.xlu0 %v621, 1
      %v626 = vpop.permute.xlu0 %625
      %627 = vrot.lane.b32.xlu0 %v622, 1
      %v628 = vpop.permute.xlu0 %627
      %v629 = vsel %vm360, %v626, %v628
      %v630 = vsel %vm360, %v628, %v626
      %631 = vrot.lane.b32.xlu0 %v621, 127
      %v632 = vpop.permute.xlu0 %631
      %633 = vrot.lane.b32.xlu0 %v622, 127
      %v634 = vpop.permute.xlu0 %633
      %v635 = vsel %vm367, %v632, %v634
      %v636 = vsel %vm367, %v634, %v632
      %v637 = vsel %vm379, %v635, %v630
      %v638 = vsel %vm380, %v636, %v629
      %v639 = vsel %vm392, %v630, %v635
      %v640 = vsel %vm393, %v629, %v636
      %641 = vst [vmem:[#allocation3] sm:$0xf] %v637
      %642 = vst [vmem:[#allocation3 + $0x8] sm:$0xf] %v638
      %v645 = vrot.slane %v621, 4
      %v646 = vrot.slane %v622, 4
      %649 = vst [vmem:[#allocation3] sm:$0xf0] %v645
      %650 = vst [vmem:[#allocation3 + $0x8] sm:$0xf0] %v646
      %651 = vst [vmem:[#allocation3 + $0x10] sm:$0xf] %v639
      %652 = vst [vmem:[#allocation3 + $0x18] sm:$0xf] %v640
      %653 = vrot.lane.b32.xlu0 %v607, 1
      %v654 = vpop.permute.xlu0 %653
      %655 = vrot.lane.b32.xlu0 %v608, 1
      %v656 = vpop.permute.xlu0 %655
      %v657 = vsel %vm360, %v654, %v656
      %v658 = vsel %vm360, %v656, %v654
      %659 = vrot.lane.b32.xlu0 %v607, 127
      %v660 = vpop.permute.xlu0 %659
      %661 = vrot.lane.b32.xlu0 %v608, 127
      %v662 = vpop.permute.xlu0 %661
      %v663 = vsel %vm367, %v660, %v662
      %v664 = vsel %vm367, %v662, %v660
      %v665 = vsel %vm379, %v663, %v658
      %v666 = vsel %vm380, %v664, %v657
      %v667 = vsel %vm392, %v658, %v663
      %v668 = vsel %vm393, %v657, %v664
      %v671 = vrot.slane %v665, 4
      %v672 = vrot.slane %v666, 4
      %675 = vst [vmem:[#allocation3 + $0x10] sm:$0xf0] %v671
      %676 = vst [vmem:[#allocation3 + $0x18] sm:$0xf0] %v672
      %677 = vst [vmem:[#allocation3 + $0x20] sm:$0xf] %v607
      %678 = vst [vmem:[#allocation3 + $0x28] sm:$0xf] %v608
      %v681 = vrot.slane %v667, 4
      %v682 = vrot.slane %v668, 4
      %685 = vst [vmem:[#allocation3 + $0x20] sm:$0xf0] %v681
      %686 = vst [vmem:[#allocation3 + $0x28] sm:$0xf0] %v682
      %687 = vrot.lane.b32.xlu0 %v623, 1
      %v688 = vpop.permute.xlu0 %687
      %689 = vrot.lane.b32.xlu0 %v624, 1
      %v690 = vpop.permute.xlu0 %689
      %v691 = vsel %vm360, %v688, %v690
      %v692 = vsel %vm360, %v690, %v688
      %693 = vrot.lane.b32.xlu0 %v623, 127
      %v694 = vpop.permute.xlu0 %693
      %695 = vrot.lane.b32.xlu0 %v624, 127
      %v696 = vpop.permute.xlu0 %695
      %v697 = vsel %vm367, %v694, %v696
      %v698 = vsel %vm367, %v696, %v694
      %v699 = vsel %vm379, %v697, %v692
      %v700 = vsel %vm380, %v698, %v691
      %v701 = vsel %vm392, %v692, %v697
      %v702 = vsel %vm393, %v691, %v698
      %703 = vst [vmem:[#allocation3 + $0x30] sm:$0xf] %v699
      %704 = vst [vmem:[#allocation3 + $0x38] sm:$0xf] %v700
      %v707 = vrot.slane %v623, 4
      %v708 = vrot.slane %v624, 4
      %711 = vst [vmem:[#allocation3 + $0x30] sm:$0xf0] %v707
      %712 = vst [vmem:[#allocation3 + $0x38] sm:$0xf0] %v708
      %713 = vst [vmem:[#allocation3 + $0x40] sm:$0xf] %v701
      %714 = vst [vmem:[#allocation3 + $0x48] sm:$0xf] %v702
      %s715 = scalar_lea.vmem %s281, 4
      %v716 = vld [vmem:[%s715] sm:$0xf]
      %v717 = vld [vmem:[#allocation3] sm:$0xff]
      %v718 = vld [vmem:[#allocation3 + $0x8] sm:$0xff]
      %v719 = vld [vmem:[#allocation3 + $0x10] sm:$0xff]
      %v720 = vld [vmem:[#allocation3 + $0x18] sm:$0xff]
      %v721 = vld [vmem:[#allocation3 + $0x20] sm:$0xff]
      %v722 = vld [vmem:[#allocation3 + $0x28] sm:$0xff]
      %v723 = vld [vmem:[#allocation3 + $0x30] sm:$0xff]
      %v724 = vld [vmem:[#allocation3 + $0x38] sm:$0xff]
      %v725 = vld [vmem:[#allocation3 + $0x40] sm:$0xf]
      %v726 = vld [vmem:[#allocation3 + $0x48] sm:$0xf]
      %v728 = vsel %vm481, %v716, 0
      %v731 = vsel %vm485, %v725, 0
      %v734 = vsel %vm485, %v726, 0
      %736 = vmatprep.subr.mxu0 0.0
      %737 = vmatpush1.msra.mxu0 0.0
      %738 = vmatprep.subr.mxu0 0.0
      %739 = vmatpush1.msra.mxu0 0.0
      %740 = vmatprep.subr.mxu0 0.0
      %741 = vmatpush1.msra.mxu0 0.0
      %742 = vmatprep.subr.mxu0 0.0
      %743 = vmatpush1.msra.mxu0 0.0
      %744 = vmatprep.subr.mxu0 0.0
      %745 = vmatpush1.msra.mxu0 0.0
      %746 = vmatprep.subr.mxu0 0.0
      %747 = vmatpush1.msra.mxu0 0.0
      %748 = vmatprep.subr.mxu0 0.0
      %749 = vmatpush1.msra.mxu0 0.0
      %750 = vmatprep.subr.mxu0 0.0
      %751 = vmatpush1.msra.mxu0 0.0
      %752 = vmatprep.subr.mxu0 0.0
      %753 = vmatpush1.msra.mxu0 0.0
      %754 = vmatprep.subr.mxu0 0.0
      %755 = vmatpush1.msra.mxu0 0.0
      %756 = vmatprep.subr.mxu0 0.0
      %757 = vmatpush1.msra.mxu0 0.0
      %758 = vmatprep.subr.mxu0 %v734
      %759 = vmatpush1.msra.mxu0 %v731
      %760 = vmatprep.subr.mxu0 %v724
      %761 = vmatpush1.msra.mxu0 %v723
      %762 = vmatprep.subr.mxu0 %v722
      %763 = vmatpush1.msra.mxu0 %v721
      %764 = vmatprep.subr.mxu0 %v720
      %765 = vmatpush1.msra.mxu0 %v719
      %766 = vmatprep.subr.mxu0 %v718
      %767 = vmatpush1.msra.mxu0 %v717
      %768 = vmatprep.subr.mxu0 0.0
      %769 = vmatpush2.msra.mxu0 0.0
      %770 = vmatprep.subr.mxu0 0.0
      %771 = vmatpush2.msra.mxu0 0.0
      %772 = vmatprep.subr.mxu0 0.0
      %773 = vmatpush2.msra.mxu0 0.0
      %774 = vmatprep.subr.mxu0 0.0
      %775 = vmatpush2.msra.mxu0 0.0
      %776 = vmatprep.subr.mxu0 0.0
      %777 = vmatpush2.msra.mxu0 0.0
      %778 = vmatprep.subr.mxu0 0.0
      %779 = vmatpush2.msra.mxu0 0.0
      %780 = vmatprep.subr.mxu0 0.0
      %781 = vmatpush2.msra.mxu0 0.0
      %782 = vmatprep.subr.mxu0 0.0
      %783 = vmatpush2.msra.mxu0 0.0
      %784 = vmatprep.subr.mxu0 0.0
      %785 = vmatpush2.msra.mxu0 0.0
      %786 = vmatprep.subr.mxu0 0.0
      %787 = vmatpush2.msra.mxu0 0.0
      %788 = vmatprep.subr.mxu0 0.0
      %789 = vmatpush2.msra.mxu0 0.0
      %790 = vmatprep.subr.mxu0 0.0
      %791 = vmatpush2.msra.mxu0 0.0
      %792 = vmatprep.subr.mxu0 0.0
      %793 = vmatpush2.msra.mxu0 0.0
      %794 = vmatprep.subr.mxu0 0.0
      %795 = vmatpush2.msra.mxu0 0.0
      %796 = vmatprep.subr.mxu0 0.0
      %797 = vmatpush2.msra.mxu0 0.0
      %798 = vmatprep.subr.mxu0 0.0
      %799 = vmatpush2.msra.mxu0 0.0
      %800 = vmatprep.mubr.f32.mxu0 0.0
      %801 = vmatmul.mubr.f32.gmra.mxu0 %v728
      %v802 = vpop.f32.mrf.mxu0
      %v803 = vadd.f32 0.0, %v802
      %v804 = vpop.f32.mrf.mxu0
      %v805 = vadd.f32 0.0, %v804
      %806 = vdwg.mxu0
      %s807 = scalar_lea.vmem %s286, 4
      %v808 = vld [vmem:[%s807] sm:$0xf]
      %810 = vset.pattern.permute.xlu0 0
      %811 = vperm.xlu0 %810, %v808
      %v812 = vpop.permute.xlu0 %811
      %v814 = vmul.f32 %v803, %v812
      %v815 = vmul.f32 %v805, %v812
      %s816 = scalar_lea.vmem %s291, 4
      %v817 = vld [vmem:[%s816] sm:$0xf]
      %819 = vset.pattern.permute.xlu0 0
      %820 = vperm.xlu0 %819, %v817
      %v821 = vpop.permute.xlu0 %820
      %v823 = vadd.f32 %v814, %v821
      %v824 = vadd.f32 %v815, %v821
      %v825 = vmul.f32 %v823, 0.3
      %v826 = vmul.f32 %v824, 0.3
      %v827 = vmax.f32 %v823, %v825
      %v828 = vmax.f32 %v824, %v826
      %v829 = vmin.f32 %v827, 20.0
      %v830 = vmin.f32 %v828, 20.0
      %v831 = vmul.f32 %v829, 1.442695
      %v832 = vpow.pop %v831
      %v833 = vmul.f32 %v830, 1.442695
      %v834 = vpow.pop %v833
      %v835 = vadd.f32 %v832, 1.0
      %v836 = vadd.f32 %v834, 1.0
      %v837 = vmul.f32 %v835, %v835
      %v838 = vmul.f32 %v836, %v836
      %v839 = vadd.f32 %v837, 1.0
      %v840 = vadd.f32 %v838, 1.0
      %v841 = vrcp.pop %v839
      %v842 = vrcp.pop %v840
      %v843 = vmul.f32 %v839, %v841
      %v844 = vmul.f32 %v840, %v842
      %v845 = vsub.f32 2.0, %v843
      %v846 = vsub.f32 2.0, %v844
      %v847 = vmul.f32 %v841, %v845
      %v848 = vmul.f32 %v842, %v846
      %v849 = vsub.f32 %v837, 1.0
      %v850 = vsub.f32 %v838, 1.0
      %v851 = vmul.f32 %v827, %v849
      %v852 = vmul.f32 %v828, %v850
      %v853 = vmul.f32 %v851, %v847
      %v854 = vmul.f32 %v852, %v848
      %v857 = vcombine.low %v853, %v854
      %v859 = vadd.f32 %v310, %v857
      %860 = vst [vmem:[#allocation2] sm:$0xff] %v859
      %p861 = scmp.eq.s32.totalorder %s21, 1
      // Predicated region
      $region45: #{res_block_forward.1} parent=39 // pred_check
        %p862 = pneg %p861
      $region46: #{res_block_forward.1} parent=39 // pred_check_branch
        %864 = sbr.rel (%p862) target = $region48
      $region47: #{res_block_forward.1} parent=39 // pred_region
        %865 = vst [vmem:[%s296] sm:$0xff] %v859
      $region48: #{res_block_forward.1} parent=39 // pred_fallthru
        _
      %p866 = scmp.lt.s32.totalorder %s20, 1
      %s867 = scalar_select %p866, %s20, 1
      %s868 = smul.addr %s867, 2
      %s869 = smul.addr %s868, 4
      %s870 = scalar_lea.vmem %s5, %s869
      // Predicated region
      $region49: #{res_block_forward.1} parent=39 // pred_check
        %p871 = pneg %p171
      $region50: #{res_block_forward.1} parent=39 // pred_check_branch
        %873 = sbr.rel (%p871) target = $region52
      $region51: #{res_block_forward.1} parent=39 // pred_region
        _
      $region52: #{res_block_forward.1} parent=39 // pred_fallthru
        _
    $region40: #{res_block_forward.1} parent=5 // pred_fallthru
      _
    %p874 = scmp.le.s32.totalorder 2, %s11
    // Predicated region
    $region53: #{res_block_forward.1} parent=5 // pred_check
      %p875 = pneg %p874
    $region54: #{res_block_forward.1} parent=5 // pred_check_branch
      %877 = sbr.rel (%p875) target = $region56
    $region55: #{res_block_forward.1} parent=5 // pred_region
      %s878 = ssub.s32 %s11, 2
      // Predicated region
      $region57: #{res_block_forward.1} parent=55 // pred_check
        %p879 = pneg %p177
      $region58: #{res_block_forward.1} parent=55 // pred_check_branch
        %881 = sbr.rel (%p879) target = $region60
      $region59: #{res_block_forward.1} parent=55 // pred_region
        %p882 = scmp.lt.s32.totalorder %s22, 1
        %s883 = scalar_select %p882, %s22, 1
        %s884 = smul.addr %s883, 2
        %s885 = smul.addr %s884, 4
        %s886 = scalar_lea.vmem %s5, %s885
      $region60: #{res_block_forward.1} parent=55 // pred_fallthru
        _
    $region56: #{res_block_forward.1} parent=5 // pred_fallthru
      _
  $region6: #{res_block_forward.1} parent=0 // loop_footer
    %s15 = sadd.s32 1, %s11
  $region7: #{res_block_forward.1} parent=0 // loop_footer_branch
    %10 = sbr.rel target = $region3
  $region8: #{res_block_forward.1} parent=0 // loop_exit
    _

</llo_original>
